<compile_context>
chip_gen: v5e
topology: v5e:2x2
jax: 0.10.0
libtpu: 0.0.40
codegen_flags: <defaults>
</compile_context>

<pallas_src>
import functools

import jax
import jax.numpy as jnp
from jax import lax
from jax.experimental import pallas as pl
from jax.experimental.pallas import tpu as pltpu


def _patch_embed_ln_kernel(x_ref, w_ref, b_ref, g_ref, beta_ref, o_ref, *, eps, inv_d):
    # x_ref:    (tt, K)  tokens-by-patch-pixels, native layout (K = ps * C)
    # w_ref:    (D, K)   permuted conv weight, already in output orientation
    # b_ref:    (D, 1)   conv bias   (f32, grid-invariant)
    # g_ref:    (D, 1)   LN gamma    (f32, grid-invariant)
    # beta_ref: (D, 1)   LN beta     (f32, grid-invariant)
    # o_ref:    (D, tt)  tile of the (B, D, T') output (no in-kernel transpose)
    h = lax.dot_general(
        w_ref[...], x_ref[...],
        dimension_numbers=(((1,), (1,)), ((), ())),   # contract K with K -> (D, tt)
        preferred_element_type=jnp.float32)
    h = h + b_ref[...]                                # conv bias, lane-broadcast

    # Single-pass LayerNorm statistics over D (sublane axis): var = E[h^2] - mean^2.
    s1 = jnp.sum(h, axis=0, keepdims=True)            # (1, tt)
    s2 = jnp.sum(h * h, axis=0, keepdims=True)        # (1, tt)
    mean = s1 * inv_d
    var = s2 * inv_d - mean * mean
    inv_std = lax.rsqrt(var + eps)

    y = (h - mean) * inv_std * g_ref[...] + beta_ref[...]
    o_ref[...] = y.astype(o_ref.dtype)                # single cast, at the store


def _vmem_capacity_bytes():
    try:
        return int(pltpu.get_tpu_info().vmem_capacity_bytes)
    except Exception:
        return 64 * 1024 * 1024   # v7x floor: the most conservative assumption


def _round_down_128(n):
    return (n // 128) * 128


def _tile_vmem_bytes(tt, K, D, in_bytes, out_bytes):
    """Complete per-step VMEM model: double-buffered DMA tiles + live f32
    intermediates + grid-invariant operands, including lane padding of K<128."""
    kp = pl.cdiv(K, 128) * 128              # (tt, K) input occupies lanes padded to 128
    dp = pl.cdiv(D, 8) * 8
    x_tiles = 2 * tt * kp * in_bytes        # double-buffered input tile
    o_tiles = 2 * dp * tt * out_bytes       # double-buffered output tile
    interm = 3 * dp * tt * 4                # f32 h / fused-stat temps / y
    w_const = 2 * dp * kp * in_bytes        # (D, K) weight (grid-invariant)
    p_const = 3 * 2 * dp * 128 * 4          # (D, 1) bias/gamma/beta (lane-padded)
    return x_tiles + o_tiles + interm + w_const + p_const


def _pick_token_tile(B, Tp, K, D, in_bytes, out_bytes, *, target=4096, budget=24 << 20):
    """Largest lane-aligned token tile fitting the VMEM budget; guarantees >= 2
    grid steps (v7x megacore) whenever the token dim is big enough to split."""
    def fits(t):
        return _tile_vmem_bytes(t, K, D, in_bytes, out_bytes) <= budget

    if Tp <= 128:
        return Tp                                       # full dim: always a legal block
    if Tp <= target and fits(Tp):
        tt = Tp
    else:
        tt = max(128, _round_down_128(min(target, Tp)))
        while tt > 128 and not fits(tt):
            tt -= 128
    # v7x megacore: if the whole (B, token) grid would be a single step, split
    # the token dim so both TensorCores get work.
    if B * pl.cdiv(Tp, tt) < 2 and Tp >= 256:
        tt = max(128, _round_down_128(Tp // 2))
    return tt


def spectrogram_patch_embed(x, conv_w, conv_b, ln_g, ln_b, *,
                            patch_size, patch_channel_dim, eps=1e-5,
                            out_dtype=None, compute_dtype=None, token_tile=None):
    """x: (B, T, C) with C == patch_channel_dim. Returns (B, D, T // patch_size).

    out_dtype / compute_dtype default to x.dtype (module-faithful); pass
    jnp.bfloat16 to cut HBM traffic if the downstream consumer tolerates it.
    """
    B, T, C = x.shape
    ps, pcd = patch_size, patch_channel_dim
    assert C == pcd, "kernel (like the module's squeeze(2)) requires C == patch_channel_dim"
    D = conv_w.shape[0]
    Tp = T // ps                       # Conv2d floor behaviour on the time axis
    K = ps * C

    out_dtype = x.dtype if out_dtype is None else jnp.dtype(out_dtype)
    compute_dtype = x.dtype if compute_dtype is None else jnp.dtype(compute_dtype)

    # Zero-cost contiguous view: xr[b, t', j*C + i] = x[b, t'*ps + j, i]
    xr = x[:, :Tp * ps, :].reshape(B, Tp, K).astype(compute_dtype)

    # Fold the patch permutation into the tiny weight, already transposed into
    # output orientation: wd[d, j*C + i] = W[d, 0, i, j]
    wd = jnp.transpose(conv_w[:, 0, :, :], (0, 2, 1)).reshape(D, K).astype(compute_dtype)

    # bias / gamma / beta as (D, 1) f32 operands (grid-invariant -> fetched once).
    bias = conv_b.reshape(D, 1).astype(jnp.float32)
    gamma = ln_g.reshape(D, 1).astype(jnp.float32)
    beta = ln_b.reshape(D, 1).astype(jnp.float32)

    in_bytes = jnp.dtype(compute_dtype).itemsize
    out_bytes = jnp.dtype(out_dtype).itemsize
    vmem_cap = _vmem_capacity_bytes()
    if token_tile is None:
        tt = _pick_token_tile(B, Tp, K, D, in_bytes, out_bytes,
                              target=4096, budget=int(vmem_cap * 0.4))
    else:
        tt = token_tile

    grid = (B, pl.cdiv(Tp, tt))
    vmem_limit = max(32 * 1024 * 1024,
                     min(int(vmem_cap * 3 // 4), 96 * 1024 * 1024))

    out = pl.pallas_call(
        functools.partial(_patch_embed_ln_kernel, eps=eps, inv_d=1.0 / D),
        out_shape=jax.ShapeDtypeStruct((B, D, Tp), out_dtype),
        grid_spec=pltpu.PrefetchScalarGridSpec(
            num_scalar_prefetch=0,
            grid=grid,
            in_specs=[
                pl.BlockSpec((None, tt, K), lambda b, t: (b, t, 0)),
                pl.BlockSpec((D, K), lambda b, t: (0, 0)),
                pl.BlockSpec((D, 1), lambda b, t: (0, 0)),
                pl.BlockSpec((D, 1), lambda b, t: (0, 0)),
                pl.BlockSpec((D, 1), lambda b, t: (0, 0)),
            ],
            out_specs=pl.BlockSpec((None, D, tt), lambda b, t: (b, 0, t)),
        ),
        compiler_params=pltpu.CompilerParams(
            dimension_semantics=("parallel", "parallel"),
            vmem_limit_bytes=vmem_limit),
    )(xr, wd, bias, gamma, beta)
    return out


def _reference(x, conv_w, conv_b, ln_g, ln_b, *, patch_size, patch_channel_dim, eps=1e-5):
    # Independent reference mirroring the PyTorch conv flattening (k = i*ps + j),
    # so the permuted-weight trick inside the kernel is validated against it.
    B, T, C = x.shape
    D = conv_w.shape[0]
    ps, pcd = patch_size, patch_channel_dim
    Tp = T // ps
    xp = jnp.transpose(x[:, :Tp * ps].reshape(B, Tp, ps, pcd),
                       (0, 1, 3, 2)).reshape(B * Tp, pcd * ps)
    h = xp.astype(jnp.float32) @ conv_w.reshape(D, pcd * ps).T.astype(jnp.float32) + conv_b
    mean = jnp.mean(h, axis=-1, keepdims=True)
    var = jnp.mean((h - mean) ** 2, axis=-1, keepdims=True)
    y = (h - mean) * jax.lax.rsqrt(var + eps) * ln_g + ln_b
    return jnp.transpose(y.reshape(B, Tp, D), (0, 2, 1)).astype(x.dtype)


if __name__ == "__main__":
    key = jax.random.PRNGKey(0)

    def run_case(B, T, ps, pcd, D, token_tile=None):
        kx, kw, kb = jax.random.split(jax.random.fold_in(key, T), 3)
        x = jax.random.normal(kx, (B, T, pcd), dtype=jnp.float32)
        fan_in = pcd * ps
        conv_w = jax.random.normal(kw, (D, 1, pcd, ps), dtype=jnp.float32) / jnp.sqrt(fan_in)
        conv_b = jax.random.normal(kb, (D,), dtype=jnp.float32) * 0.02
        ln_g = jnp.linspace(0.5, 1.5, D, dtype=jnp.float32)
        ln_b = jnp.linspace(-0.1, 0.1, D, dtype=jnp.float32)

        out = spectrogram_patch_embed(
            x, conv_w, conv_b, ln_g, ln_b,
            patch_size=ps, patch_channel_dim=pcd, token_tile=token_tile)
        out = jax.block_until_ready(out)

        ref = _reference(x, conv_w, conv_b, ln_g, ln_b,
                         patch_size=ps, patch_channel_dim=pcd)
        assert out.shape == (B, D, T // ps), out.shape
        err = float(jnp.max(jnp.abs(out - ref)))
        assert jnp.allclose(out, ref, atol=5e-4, rtol=5e-4), err

    # Main case: small shapes consistent with the module (C == patch_channel_dim).
    run_case(B=2, T=512, ps=2, pcd=32, D=128)
    # Partial-tile case: Tp = 192 with a forced 128-token tile exercises the
    # clipped (non-divisible) last block on both the input and output side.
    run_case(B=1, T=384, ps=2, pcd=32, D=128, token_tile=128)

    print("KERNEL_OK")
</pallas_src>

<mosaic_0001>
module attributes {stable_mosaic.version = 11 : i64} {
  func.func @_patch_embed_ln_kernel(%arg0: i32, %arg1: i32, %arg2: memref<1x256x64xf32, #tpu.memory_space<vmem>>, %arg3: memref<128x64xf32, #tpu.memory_space<vmem>>, %arg4: memref<128x1xf32, #tpu.memory_space<vmem>>, %arg5: memref<128x1xf32, #tpu.memory_space<vmem>>, %arg6: memref<128x1xf32, #tpu.memory_space<vmem>>, %arg7: memref<1x128x256xf32, #tpu.memory_space<vmem>>) attributes {dimension_semantics = [#tpu.dimension_semantics<parallel>, #tpu.dimension_semantics<parallel>], iteration_bounds = array<i64: 2, 1>, scalar_prefetch = 0 : i64, scratch_operands = 0 : i64, tpu.core_type = #tpu.core_type<tc>, window_params = [{transform_indices = @transform_0, window_bounds = array<i64: 1, 256, 64>}, {pipeline_mode = #tpu.pipeline_mode<synchronous>, transform_indices = @transform_1, window_bounds = array<i64: 128, 64>}, {pipeline_mode = #tpu.pipeline_mode<synchronous>, transform_indices = @transform_2, window_bounds = array<i64: 128, 1>}, {pipeline_mode = #tpu.pipeline_mode<synchronous>, transform_indices = @transform_3, window_bounds = array<i64: 128, 1>}, {pipeline_mode = #tpu.pipeline_mode<synchronous>, transform_indices = @transform_4, window_bounds = array<i64: 128, 1>}, {transform_indices = @transform_5, window_bounds = array<i64: 1, 128, 256>}]} {
    %c0 = arith.constant 0 : index
    %c0_0 = arith.constant 0 : index
    %0 = vector.load %arg3[%c0, %c0_0] : memref<128x64xf32, #tpu.memory_space<vmem>>, vector<128x64xf32>
    %c0_1 = arith.constant 0 : index
    %c0_2 = arith.constant 0 : index
    %c0_3 = arith.constant 0 : index
    %1 = vector.load %arg2[%c0_1, %c0_2, %c0_3] : memref<1x256x64xf32, #tpu.memory_space<vmem>>, vector<1x256x64xf32>
    %2 = vector.shape_cast %1 : vector<1x256x64xf32> to vector<256x64xf32>
    %cst = arith.constant dense<0.000000e+00> : vector<128x256xf32>
    %3 = tpu.matmul %0, %2, %cst {dimension_numbers = #tpu.dot_dimension_numbers<[1], [1], [0], [0], [0, 0, 1, 0], [], []>} : vector<128x64xf32>, vector<256x64xf32>, vector<128x256xf32> -> vector<128x256xf32>
    %c0_4 = arith.constant 0 : index
    %c0_5 = arith.constant 0 : index
    %4 = vector.load %arg4[%c0_4, %c0_5] : memref<128x1xf32, #tpu.memory_space<vmem>>, vector<128x1xf32>
    %5 = vector.broadcast %4 : vector<128x1xf32> to vector<128x256xf32>
    %6 = arith.addf %3, %5 : vector<128x256xf32>
    %cst_6 = arith.constant dense<0.000000e+00> : vector<256xf32>
    %7 = vector.multi_reduction <add>, %6, %cst_6 [0] : vector<128x256xf32> to vector<256xf32>
    %8 = vector.shape_cast %7 : vector<256xf32> to vector<1x256xf32>
    %9 = arith.mulf %6, %6 : vector<128x256xf32>
    %cst_7 = arith.constant dense<0.000000e+00> : vector<256xf32>
    %10 = vector.multi_reduction <add>, %9, %cst_7 [0] : vector<128x256xf32> to vector<256xf32>
    %11 = vector.shape_cast %10 : vector<256xf32> to vector<1x256xf32>
    %cst_8 = arith.constant 7.812500e-03 : f32
    %12 = vector.broadcast %cst_8 : f32 to vector<1x256xf32>
    %13 = arith.mulf %8, %12 : vector<1x256xf32>
    %cst_9 = arith.constant 7.812500e-03 : f32
    %14 = vector.broadcast %cst_9 : f32 to vector<1x256xf32>
    %15 = arith.mulf %11, %14 : vector<1x256xf32>
    %16 = arith.mulf %13, %13 : vector<1x256xf32>
    %17 = arith.subf %15, %16 : vector<1x256xf32>
    %cst_10 = arith.constant 9.99999974E-6 : f32
    %18 = vector.broadcast %cst_10 : f32 to vector<1x256xf32>
    %19 = arith.addf %17, %18 : vector<1x256xf32>
    %20 = math.rsqrt %19 : vector<1x256xf32>
    %21 = vector.broadcast %13 : vector<1x256xf32> to vector<128x256xf32>
    %22 = arith.subf %6, %21 : vector<128x256xf32>
    %23 = vector.broadcast %20 : vector<1x256xf32> to vector<128x256xf32>
    %24 = arith.mulf %22, %23 : vector<128x256xf32>
    %c0_11 = arith.constant 0 : index
    %c0_12 = arith.constant 0 : index
    %25 = vector.load %arg5[%c0_11, %c0_12] : memref<128x1xf32, #tpu.memory_space<vmem>>, vector<128x1xf32>
    %26 = vector.broadcast %25 : vector<128x1xf32> to vector<128x256xf32>
    %27 = arith.mulf %24, %26 : vector<128x256xf32>
    %c0_13 = arith.constant 0 : index
    %c0_14 = arith.constant 0 : index
    %28 = vector.load %arg6[%c0_13, %c0_14] : memref<128x1xf32, #tpu.memory_space<vmem>>, vector<128x1xf32>
    %29 = vector.broadcast %28 : vector<128x1xf32> to vector<128x256xf32>
    %30 = arith.addf %27, %29 : vector<128x256xf32>
    %c0_15 = arith.constant 0 : index
    %c0_16 = arith.constant 0 : index
    %c0_17 = arith.constant 0 : index
    %31 = vector.load %arg7[%c0_15, %c0_16, %c0_17] : memref<1x128x256xf32, #tpu.memory_space<vmem>>, vector<1x128x256xf32>
    %32 = vector.shape_cast %31 : vector<1x128x256xf32> to vector<128x256xf32>
    %33 = vector.shape_cast %30 : vector<128x256xf32> to vector<1x128x256xf32>
    tpu.vector_store %arg7[%c0_15, %c0_16, %c0_17], %33 {strides = array<i32>} : memref<1x128x256xf32, #tpu.memory_space<vmem>>, vector<1x128x256xf32>,
    return
  }
  func.func @transform_0(%arg0: i32, %arg1: i32) -> (i32, i32, i32) {
    %c0_i32 = arith.constant 0 : i32
    %c0_i32_0 = arith.constant 0 : i32
    return %arg0, %arg1, %c0_i32 : i32, i32, i32
  }
  func.func @transform_1(%arg0: i32, %arg1: i32) -> (i32, i32) {
    %c0_i32 = arith.constant 0 : i32
    %c0_i32_0 = arith.constant 0 : i32
    %c0_i32_1 = arith.constant 0 : i32
    return %c0_i32, %c0_i32_0 : i32, i32
  }
  func.func @transform_2(%arg0: i32, %arg1: i32) -> (i32, i32) {
    %c0_i32 = arith.constant 0 : i32
    %c0_i32_0 = arith.constant 0 : i32
    %c0_i32_1 = arith.constant 0 : i32
    return %c0_i32, %c0_i32_0 : i32, i32
  }
  func.func @transform_3(%arg0: i32, %arg1: i32) -> (i32, i32) {
    %c0_i32 = arith.constant 0 : i32
    %c0_i32_0 = arith.constant 0 : i32
    %c0_i32_1 = arith.constant 0 : i32
    return %c0_i32, %c0_i32_0 : i32, i32
  }
  func.func @transform_4(%arg0: i32, %arg1: i32) -> (i32, i32) {
    %c0_i32 = arith.constant 0 : i32
    %c0_i32_0 = arith.constant 0 : i32
    %c0_i32_1 = arith.constant 0 : i32
    return %c0_i32, %c0_i32_0 : i32, i32
  }
  func.func @transform_5(%arg0: i32, %arg1: i32) -> (i32, i32, i32) {
    %c0_i32 = arith.constant 0 : i32
    %c0_i32_0 = arith.constant 0 : i32
    return %arg0, %c0_i32, %arg1 : i32, i32, i32
  }
}

</mosaic_0001>

<llo_original>
// kernel: tpu_custom_call.1
$region0: #{tpu_custom_call.1}
  #allocation0 [shape = 'u32[]', space=smem, size = 0x4, offset = 0x4, fixed_abs, tag = 'smem constant byte address 0x4 - core index']
  #allocation1 [shape = 'u32[72,128]{1,0:T(1,128)}', space=vmem, size = 0x9000, scoped, tag = 'internal scratch']
  %s0 = inlined_call_operand.vmem [shape: f32[2,256,64], index: 0, kind: input, shape index: {}]
  %s1 = inlined_call_operand.vmem [shape: f32[128,64], index: 1, kind: input, shape index: {}]
  %s2 = inlined_call_operand.vmem [shape: f32[128,1], index: 2, kind: input, shape index: {}]
  %s3 = inlined_call_operand.vmem [shape: f32[128,1], index: 3, kind: input, shape index: {}]
  %s4 = inlined_call_operand.vmem [shape: f32[128,1], index: 4, kind: input, shape index: {}]
  %s5 = inlined_call_operand.hbm [shape: f32[2,128,256], index: 5, kind: output, shape index: {}]
  %s6 = sld [smem:[#allocation0]]
  $region53: #{tpu_custom_call.1} parent=0
    _
  %s8 = ssub.s32 1, %s6
  %s9 = scalar_select 0, %s8, %s6
  $region1: #{tpu_custom_call.1} parent=0
    #allocation2 [shape = 'u8[262144]{0}', space=vmem, size = 0x40000, scoped, tag = 'output window, operand 0']
    #allocation3 [shape = 's32[2]{0}', space=sflag, size = 0x8, scoped, tag = 'scoped memory for tpu_custom_call.1']
    %10 = vsyncpa [#allocation3], 0
    %s11 = scalar_lea.sflag [#allocation3], 1
    %12 = vsyncpa %s11, 0
    loop: start=0, step=1, limit=4
    $region2: #{tpu_custom_call.1} parent=1 // loop_pre_header
      _
    $region3: #{tpu_custom_call.1} parent=1 // loop_header
      %s14 = sphi 0, %s18
      %p15 = scmp.ge.s32.totalorder %s14, 4
      %s21 = sphi 0, %s33
      %s22 = sphi 0, %s29
      %s23 = sphi 0, %s21
      %s24 = sphi 0, %s22
      %s25 = sphi 0, %s23
      %s26 = sphi 0, %s24
      %s38 = sphi 0, %s40
      %s41 = sphi 0, %s38
      %s42 = sphi 0, %s41
      %s58 = sphi 0, %s42
      %s62 = sphi 0, %s62
      %s64 = sphi 0, %s62
      %s65 = sphi 0, %s64
      %s79 = sphi 0, %s65
      %s83 = sphi 0, %s83
      %s85 = sphi 0, %s83
      %s86 = sphi 0, %s85
      %s100 = sphi 0, %s86
      %s104 = sphi 0, %s104
      %s106 = sphi 0, %s104
      %s107 = sphi 0, %s106
      %s121 = sphi 0, %s107
      %s125 = sphi 0, %s125
      %s127 = sphi 0, %s125
      %s128 = sphi 0, %s127
      %s142 = sphi 0, %s128
      %s150 = sphi 0, %s152
      %s153 = sphi 0, %s150
      %s154 = sphi 0, %s153
      %s170 = sphi 0, %s154
    $region4: #{tpu_custom_call.1} parent=1 // loop_header_branch
      %17 = sbr.rel (%p15) target = $region8
    $region5: #{tpu_custom_call.1} parent=1 // loop_body
      %s19 = ssub.s32 %s14, 1
      %s20 = ssub.s32 %s14, 2
      %s27 = sadd.s32 1, %s22
      %p28 = scmp.ge.s32.totalorder %s27, 1
      %s29 = scalar_select %p28, 0, %s27
      %s30 = sadd.s32 1, %s21
      %s31 = scalar_select %p28, %s30, %s21
      %p32 = scmp.ge.s32.totalorder %s31, 2
      %s33 = scalar_select %p32, 0, %s31
      %s34 = ssub.s32 %s21, %s33
      %s35 = ssub.s32 %s22, %s29
      %s36 = sor.u32 %s34, %s35
      %p37 = scmp.eq.s32.totalorder %s36, 0
      %s39 = sadd.s32 %s38, 1
      %s40 = scalar_select %p37, %s38, %s39
      %p43 = pneg %p37
      %p44 = scmp.eq.s32.totalorder %s14, 1
      %p45 = por %p43, %p44
      %p46 = scmp.ne.s32.totalorder %s38, %s41
      %p47 = scmp.eq.s32.totalorder %s14, 0
      %p48 = por %p46, %p47
      %p49 = scmp.ne.s32.totalorder %s38, %s41
      %p50 = scmp.eq.s32.totalorder %s19, 1
      %p51 = por %p49, %p50
      %p52 = scmp.ne.s32.totalorder %s41, %s42
      %p53 = scmp.eq.s32.totalorder %s19, 0
      %p54 = por %p52, %p53
      %p55 = scmp.ne.s32.totalorder %s41, %s42
      %p56 = scmp.eq.s32.totalorder %s20, 1
      %p57 = por %p55, %p56
      %p59 = scmp.ne.s32.totalorder %s42, %s58
      %p60 = scmp.eq.s32.totalorder %s20, 0
      %p61 = por %p59, %p60
      %s63 = sadd.s32 %s62, 1
      %p66 = scmp.eq.s32.totalorder %s14, 1
      %p67 = scmp.ne.s32.totalorder %s62, %s64
      %p68 = scmp.eq.s32.totalorder %s14, 0
      %p69 = por %p67, %p68
      %p70 = scmp.ne.s32.totalorder %s62, %s64
      %p71 = scmp.eq.s32.totalorder %s19, 1
      %p72 = por %p70, %p71
      %p73 = scmp.ne.s32.totalorder %s64, %s65
      %p74 = scmp.eq.s32.totalorder %s19, 0
      %p75 = por %p73, %p74
      %p76 = scmp.ne.s32.totalorder %s64, %s65
      %p77 = scmp.eq.s32.totalorder %s20, 1
      %p78 = por %p76, %p77
      %p80 = scmp.ne.s32.totalorder %s65, %s79
      %p81 = scmp.eq.s32.totalorder %s20, 0
      %p82 = por %p80, %p81
      %s84 = sadd.s32 %s83, 1
      %p87 = scmp.eq.s32.totalorder %s14, 1
      %p88 = scmp.ne.s32.totalorder %s83, %s85
      %p89 = scmp.eq.s32.totalorder %s14, 0
      %p90 = por %p88, %p89
      %p91 = scmp.ne.s32.totalorder %s83, %s85
      %p92 = scmp.eq.s32.totalorder %s19, 1
      %p93 = por %p91, %p92
      %p94 = scmp.ne.s32.totalorder %s85, %s86
      %p95 = scmp.eq.s32.totalorder %s19, 0
      %p96 = por %p94, %p95
      %p97 = scmp.ne.s32.totalorder %s85, %s86
      %p98 = scmp.eq.s32.totalorder %s20, 1
      %p99 = por %p97, %p98
      %p101 = scmp.ne.s32.totalorder %s86, %s100
      %p102 = scmp.eq.s32.totalorder %s20, 0
      %p103 = por %p101, %p102
      %s105 = sadd.s32 %s104, 1
      %p108 = scmp.eq.s32.totalorder %s14, 1
      %p109 = scmp.ne.s32.totalorder %s104, %s106
      %p110 = scmp.eq.s32.totalorder %s14, 0
      %p111 = por %p109, %p110
      %p112 = scmp.ne.s32.totalorder %s104, %s106
      %p113 = scmp.eq.s32.totalorder %s19, 1
      %p114 = por %p112, %p113
      %p115 = scmp.ne.s32.totalorder %s106, %s107
      %p116 = scmp.eq.s32.totalorder %s19, 0
      %p117 = por %p115, %p116
      %p118 = scmp.ne.s32.totalorder %s106, %s107
      %p119 = scmp.eq.s32.totalorder %s20, 1
      %p120 = por %p118, %p119
      %p122 = scmp.ne.s32.totalorder %s107, %s121
      %p123 = scmp.eq.s32.totalorder %s20, 0
      %p124 = por %p122, %p123
      %s126 = sadd.s32 %s125, 1
      %p129 = scmp.eq.s32.totalorder %s14, 1
      %p130 = scmp.ne.s32.totalorder %s125, %s127
      %p131 = scmp.eq.s32.totalorder %s14, 0
      %p132 = por %p130, %p131
      %p133 = scmp.ne.s32.totalorder %s125, %s127
      %p134 = scmp.eq.s32.totalorder %s19, 1
      %p135 = por %p133, %p134
      %p136 = scmp.ne.s32.totalorder %s127, %s128
      %p137 = scmp.eq.s32.totalorder %s19, 0
      %p138 = por %p136, %p137
      %p139 = scmp.ne.s32.totalorder %s127, %s128
      %p140 = scmp.eq.s32.totalorder %s20, 1
      %p141 = por %p139, %p140
      %p143 = scmp.ne.s32.totalorder %s128, %s142
      %p144 = scmp.eq.s32.totalorder %s20, 0
      %p145 = por %p143, %p144
      %s146 = ssub.s32 %s21, %s33
      %s147 = ssub.s32 %s22, %s29
      %s148 = sor.u32 %s146, %s147
      %p149 = scmp.eq.s32.totalorder %s148, 0
      %s151 = sadd.s32 %s150, 1
      %s152 = scalar_select %p149, %s150, %s151
      %p155 = pneg %p149
      %p156 = scmp.eq.s32.totalorder %s14, 1
      %p157 = por %p155, %p156
      %p158 = scmp.ne.s32.totalorder %s150, %s153
      %p159 = scmp.eq.s32.totalorder %s14, 0
      %p160 = por %p158, %p159
      %p161 = scmp.ne.s32.totalorder %s150, %s153
      %p162 = scmp.eq.s32.totalorder %s19, 1
      %p163 = por %p161, %p162
      %p164 = scmp.ne.s32.totalorder %s153, %s154
      %p165 = scmp.eq.s32.totalorder %s19, 0
      %p166 = por %p164, %p165
      %p167 = scmp.ne.s32.totalorder %s153, %s154
      %p168 = scmp.eq.s32.totalorder %s20, 1
      %p169 = por %p167, %p168
      %p171 = scmp.ne.s32.totalorder %s154, %s170
      %p172 = scmp.eq.s32.totalorder %s20, 0
      %p173 = por %p171, %p172
      %p174 = scmp.le.s32.totalorder 1, %s14
      %p175 = scmp.lt.s32.totalorder %s14, 3
      %p176 = pnand %p174, %p175
      %p177 = pneg %p176
      // Predicated region
      $region9: #{tpu_custom_call.1} parent=5 // pred_check
        _
      $region10: #{tpu_custom_call.1} parent=5 // pred_check_branch
        %179 = sbr.rel (%p176) target = $region12
      $region11: #{tpu_custom_call.1} parent=5 // pred_region
        %s180 = ssub.s32 %s14, 1
        // Predicated region
        $region13: #{tpu_custom_call.1} parent=11 // pred_check
          %p181 = pneg %p75
        $region14: #{tpu_custom_call.1} parent=11 // pred_check_branch
          %183 = sbr.rel (%p181) target = $region16
        $region15: #{tpu_custom_call.1} parent=11 // pred_region
          _
        $region16: #{tpu_custom_call.1} parent=11 // pred_fallthru
          _
        // Predicated region
        $region17: #{tpu_custom_call.1} parent=11 // pred_check
          %p184 = pneg %p96
        $region18: #{tpu_custom_call.1} parent=11 // pred_check_branch
          %186 = sbr.rel (%p184) target = $region20
        $region19: #{tpu_custom_call.1} parent=11 // pred_region
          _
        $region20: #{tpu_custom_call.1} parent=11 // pred_fallthru
          _
        // Predicated region
        $region21: #{tpu_custom_call.1} parent=11 // pred_check
          %p187 = pneg %p117
        $region22: #{tpu_custom_call.1} parent=11 // pred_check_branch
          %189 = sbr.rel (%p187) target = $region24
        $region23: #{tpu_custom_call.1} parent=11 // pred_region
          _
        $region24: #{tpu_custom_call.1} parent=11 // pred_fallthru
          _
        // Predicated region
        $region25: #{tpu_custom_call.1} parent=11 // pred_check
          %p190 = pneg %p138
        $region26: #{tpu_custom_call.1} parent=11 // pred_check_branch
          %192 = sbr.rel (%p190) target = $region28
        $region27: #{tpu_custom_call.1} parent=11 // pred_region
          _
        $region28: #{tpu_custom_call.1} parent=11 // pred_fallthru
          _
      $region12: #{tpu_custom_call.1} parent=5 // pred_fallthru
        _
      %p193 = scmp.lt.s32.totalorder %s14, 2
      // Predicated region
      $region29: #{tpu_custom_call.1} parent=5 // pred_check
        %p194 = pneg %p193
      $region30: #{tpu_custom_call.1} parent=5 // pred_check_branch
        %196 = sbr.rel (%p194) target = $region32
      $region31: #{tpu_custom_call.1} parent=5 // pred_region
        // Predicated region
        $region33: #{tpu_custom_call.1} parent=31 // pred_check
          %p197 = pneg %p48
        $region34: #{tpu_custom_call.1} parent=31 // pred_check_branch
          %199 = sbr.rel (%p197) target = $region36
        $region35: #{tpu_custom_call.1} parent=31 // pred_region
          %s200 = smul.u32 32, %s22
          %p201 = scmp.lt.s32.totalorder %s21, 1
          %s202 = scalar_select %p201, %s21, 1
          %p203 = scmp.lt.s32.totalorder %s200, 31
          %s204 = scalar_select %p203, %s200, 31
          %s205 = smul.addr %s202, 32
          %s206 = sadd.s32 %s204, %s205
          %s207 = smul.addr %s206, 8
          %s208 = scalar_lea.vmem %s0, %s207
          %s209 = smul.u32 32, %s22
        $region36: #{tpu_custom_call.1} parent=31 // pred_fallthru
          _
      $region32: #{tpu_custom_call.1} parent=5 // pred_fallthru
        _
      %p210 = scmp.le.s32.totalorder 1, %s14
      %p211 = scmp.lt.s32.totalorder %s14, 3
      %p212 = pnand %p210, %p211
      %p213 = pneg %p212
      // Predicated region
      $region37: #{tpu_custom_call.1} parent=5 // pred_check
        _
      $region38: #{tpu_custom_call.1} parent=5 // pred_check_branch
        %215 = sbr.rel (%p212) target = $region40
      $region39: #{tpu_custom_call.1} parent=5 // pred_region
        %s216 = ssub.s32 %s14, 1
        %s217 = smul.u32 32, %s24
        %p218 = scmp.lt.s32.totalorder %s23, 1
        %s219 = scalar_select %p218, %s23, 1
        %p220 = scmp.lt.s32.totalorder %s217, 31
        %s221 = scalar_select %p220, %s217, 31
        %s222 = smul.addr %s219, 32
        %s223 = sadd.s32 %s221, %s222
        %s224 = smul.addr %s223, 8
        %s225 = scalar_lea.vmem %s0, %s224
        %p226 = pneg %p54
        %p227 = pneg %p51
        %p228 = pneg %p75
        %p229 = pneg %p72
        %p230 = pneg %p96
        %p231 = pneg %p93
        %p232 = pneg %p117
        %p233 = pneg %p114
        %p234 = pneg %p138
        %p235 = pneg %p135
        %p236 = pneg %p166
        %p237 = pneg %p163
        %s238 = sand.u32 %s153, 1
        %s239 = scalar_lea.sflag [#allocation3], %s238
        %s240 = sand.u32 %s153, 1
        %s241 = smul.addr %s240, 256
        %s242 = scalar_lea.vmem [#allocation2], %s241
        %s243 = smul.u32 32, %s24
        %p244 = scmp.lt.s32.totalorder %s23, 1
        %s245 = scalar_select %p244, %s23, 1
        %p246 = scmp.lt.s32.totalorder %s243, 31
        %s247 = scalar_select %p246, %s243, 31
        %s248 = smul.addr %s245, 32
        %s249 = sadd.s32 %s247, %s248
        %s250 = smul.addr %s249, 8
        %s251 = scalar_lea.vmem %s0, %s250
        %s252 = smul.u32 32, %s24
        %s253 = smul.u32 2, %s24
        %v254 = vld [vmem:[%s1] sm:$0xff]
        %v255 = vld [vmem:[%s1 + $0x8] sm:$0xff]
        %v256 = vld [vmem:[%s1 + $0x10] sm:$0xff]
        %v257 = vld [vmem:[%s1 + $0x18] sm:$0xff]
        %v258 = vld [vmem:[%s1 + $0x20] sm:$0xff]
        %v259 = vld [vmem:[%s1 + $0x28] sm:$0xff]
        %v260 = vld [vmem:[%s1 + $0x30] sm:$0xff]
        %v261 = vld [vmem:[%s1 + $0x38] sm:$0xff]
        %v262 = vld [vmem:[%s1 + $0x40] sm:$0xff]
        %v263 = vld [vmem:[%s1 + $0x48] sm:$0xff]
        %v264 = vld [vmem:[%s1 + $0x50] sm:$0xff]
        %v265 = vld [vmem:[%s1 + $0x58] sm:$0xff]
        %v266 = vld [vmem:[%s1 + $0x60] sm:$0xff]
        %v267 = vld [vmem:[%s1 + $0x68] sm:$0xff]
        %v268 = vld [vmem:[%s1 + $0x70] sm:$0xff]
        %v269 = vld [vmem:[%s1 + $0x78] sm:$0xff]
        %v270 = vld [vmem:[%s251] sm:$0xff]
        %v271 = vld [vmem:[%s251 + $0x8] sm:$0xff]
        %v272 = vld [vmem:[%s251 + $0x10] sm:$0xff]
        %v273 = vld [vmem:[%s251 + $0x18] sm:$0xff]
        %v274 = vld [vmem:[%s251 + $0x20] sm:$0xff]
        %v275 = vld [vmem:[%s251 + $0x28] sm:$0xff]
        %v276 = vld [vmem:[%s251 + $0x30] sm:$0xff]
        %v277 = vld [vmem:[%s251 + $0x38] sm:$0xff]
        %v278 = vld [vmem:[%s251 + $0x40] sm:$0xff]
        %v279 = vld [vmem:[%s251 + $0x48] sm:$0xff]
        %v280 = vld [vmem:[%s251 + $0x50] sm:$0xff]
        %v281 = vld [vmem:[%s251 + $0x58] sm:$0xff]
        %v282 = vld [vmem:[%s251 + $0x60] sm:$0xff]
        %v283 = vld [vmem:[%s251 + $0x68] sm:$0xff]
        %v284 = vld [vmem:[%s251 + $0x70] sm:$0xff]
        %v285 = vld [vmem:[%s251 + $0x78] sm:$0xff]
        %v286 = vld [vmem:[%s251 + $0x80] sm:$0xff]
        %v287 = vld [vmem:[%s251 + $0x88] sm:$0xff]
        %v288 = vld [vmem:[%s251 + $0x90] sm:$0xff]
        %v289 = vld [vmem:[%s251 + $0x98] sm:$0xff]
        %v290 = vld [vmem:[%s251 + $0xa0] sm:$0xff]
        %v291 = vld [vmem:[%s251 + $0xa8] sm:$0xff]
        %v292 = vld [vmem:[%s251 + $0xb0] sm:$0xff]
        %v293 = vld [vmem:[%s251 + $0xb8] sm:$0xff]
        %v294 = vld [vmem:[%s251 + $0xc0] sm:$0xff]
        %v295 = vld [vmem:[%s251 + $0xc8] sm:$0xff]
        %v296 = vld [vmem:[%s251 + $0xd0] sm:$0xff]
        %v297 = vld [vmem:[%s251 + $0xd8] sm:$0xff]
        %v298 = vld [vmem:[%s251 + $0xe0] sm:$0xff]
        %v299 = vld [vmem:[%s251 + $0xe8] sm:$0xff]
        %v300 = vld [vmem:[%s251 + $0xf0] sm:$0xff]
        %v301 = vld [vmem:[%s251 + $0xf8] sm:$0xff]
        %v302 = vld [vmem:[%s2] sm:$0xff]
        %v303 = vld [vmem:[%s2 + $0x8] sm:$0xff]
        %v304 = vld [vmem:[%s2 + $0x10] sm:$0xff]
        %v305 = vld [vmem:[%s2 + $0x18] sm:$0xff]
        %v306 = vld [vmem:[%s2 + $0x20] sm:$0xff]
        %v307 = vld [vmem:[%s2 + $0x28] sm:$0xff]
        %v308 = vld [vmem:[%s2 + $0x30] sm:$0xff]
        %v309 = vld [vmem:[%s2 + $0x38] sm:$0xff]
        %v310 = vld [vmem:[%s2 + $0x40] sm:$0xff]
        %v311 = vld [vmem:[%s2 + $0x48] sm:$0xff]
        %v312 = vld [vmem:[%s2 + $0x50] sm:$0xff]
        %v313 = vld [vmem:[%s2 + $0x58] sm:$0xff]
        %v314 = vld [vmem:[%s2 + $0x60] sm:$0xff]
        %v315 = vld [vmem:[%s2 + $0x68] sm:$0xff]
        %v316 = vld [vmem:[%s2 + $0x70] sm:$0xff]
        %v317 = vld [vmem:[%s2 + $0x78] sm:$0xff]
        %319 = vset.pattern.permute.xlu0 0
        %320 = vperm.xlu0 %319, %v302
        %v321 = vpop.permute.xlu0 %320
        %324 = vset.pattern.permute.xlu0 0
        %325 = vperm.xlu0 %324, %v303
        %v326 = vpop.permute.xlu0 %325
        %329 = vset.pattern.permute.xlu0 0
        %330 = vperm.xlu0 %329, %v304
        %v331 = vpop.permute.xlu0 %330
        %334 = vset.pattern.permute.xlu0 0
        %335 = vperm.xlu0 %334, %v305
        %v336 = vpop.permute.xlu0 %335
        %339 = vset.pattern.permute.xlu0 0
        %340 = vperm.xlu0 %339, %v306
        %v341 = vpop.permute.xlu0 %340
        %344 = vset.pattern.permute.xlu0 0
        %345 = vperm.xlu0 %344, %v307
        %v346 = vpop.permute.xlu0 %345
        %349 = vset.pattern.permute.xlu0 0
        %350 = vperm.xlu0 %349, %v308
        %v351 = vpop.permute.xlu0 %350
        %354 = vset.pattern.permute.xlu0 0
        %355 = vperm.xlu0 %354, %v309
        %v356 = vpop.permute.xlu0 %355
        %359 = vset.pattern.permute.xlu0 0
        %360 = vperm.xlu0 %359, %v310
        %v361 = vpop.permute.xlu0 %360
        %364 = vset.pattern.permute.xlu0 0
        %365 = vperm.xlu0 %364, %v311
        %v366 = vpop.permute.xlu0 %365
        %369 = vset.pattern.permute.xlu0 0
        %370 = vperm.xlu0 %369, %v312
        %v371 = vpop.permute.xlu0 %370
        %374 = vset.pattern.permute.xlu0 0
        %375 = vperm.xlu0 %374, %v313
        %v376 = vpop.permute.xlu0 %375
        %379 = vset.pattern.permute.xlu0 0
        %380 = vperm.xlu0 %379, %v314
        %v381 = vpop.permute.xlu0 %380
        %384 = vset.pattern.permute.xlu0 0
        %385 = vperm.xlu0 %384, %v315
        %v386 = vpop.permute.xlu0 %385
        %389 = vset.pattern.permute.xlu0 0
        %390 = vperm.xlu0 %389, %v316
        %v391 = vpop.permute.xlu0 %390
        %394 = vset.pattern.permute.xlu0 0
        %395 = vperm.xlu0 %394, %v317
        %v396 = vpop.permute.xlu0 %395
        %vm398 = vcmask 523264
        %v400 = vsel %vm398, %v254, 0
        %v403 = vsel %vm398, %v255, 0
        %v406 = vsel %vm398, %v256, 0
        %v409 = vsel %vm398, %v257, 0
        %v412 = vsel %vm398, %v258, 0
        %v415 = vsel %vm398, %v259, 0
        %v418 = vsel %vm398, %v260, 0
        %v421 = vsel %vm398, %v261, 0
        %v424 = vsel %vm398, %v262, 0
        %v427 = vsel %vm398, %v263, 0
        %v430 = vsel %vm398, %v264, 0
        %v433 = vsel %vm398, %v265, 0
        %v436 = vsel %vm398, %v266, 0
        %v439 = vsel %vm398, %v267, 0
        %v442 = vsel %vm398, %v268, 0
        %v445 = vsel %vm398, %v269, 0
        %v448 = vsel %vm398, %v270, 0
        %v451 = vsel %vm398, %v271, 0
        %v454 = vsel %vm398, %v272, 0
        %v457 = vsel %vm398, %v273, 0
        %v460 = vsel %vm398, %v274, 0
        %v463 = vsel %vm398, %v275, 0
        %v466 = vsel %vm398, %v276, 0
        %v469 = vsel %vm398, %v277, 0
        %v472 = vsel %vm398, %v278, 0
        %v475 = vsel %vm398, %v279, 0
        %v478 = vsel %vm398, %v280, 0
        %v481 = vsel %vm398, %v281, 0
        %v484 = vsel %vm398, %v282, 0
        %v487 = vsel %vm398, %v283, 0
        %v490 = vsel %vm398, %v284, 0
        %v493 = vsel %vm398, %v285, 0
        %v496 = vsel %vm398, %v286, 0
        %v499 = vsel %vm398, %v287, 0
        %v502 = vsel %vm398, %v288, 0
        %v505 = vsel %vm398, %v289, 0
        %v508 = vsel %vm398, %v290, 0
        %v511 = vsel %vm398, %v291, 0
        %v514 = vsel %vm398, %v292, 0
        %v517 = vsel %vm398, %v293, 0
        %v520 = vsel %vm398, %v294, 0
        %v523 = vsel %vm398, %v295, 0
        %v526 = vsel %vm398, %v296, 0
        %v529 = vsel %vm398, %v297, 0
        %v532 = vsel %vm398, %v298, 0
        %v535 = vsel %vm398, %v299, 0
        %v538 = vsel %vm398, %v300, 0
        %v541 = vsel %vm398, %v301, 0
        %543 = vmatpush.xpose.msra.mxu0 %v493
        %544 = vmatpush.xpose.msra.mxu0 %v490
        %545 = vmatpush.xpose.msra.mxu0 %v487
        %546 = vmatpush.xpose.msra.mxu0 %v484
        %547 = vmatpush.xpose.msra.mxu0 %v481
        %548 = vmatpush.xpose.msra.mxu0 %v478
        %549 = vmatpush.xpose.msra.mxu0 %v475
        %550 = vmatpush.xpose.msra.mxu0 %v472
        %551 = vmatpush.xpose.msra.mxu0 %v469
        %552 = vmatpush.xpose.msra.mxu0 %v466
        %553 = vmatpush.xpose.msra.mxu0 %v463
        %554 = vmatpush.xpose.msra.mxu0 %v460
        %555 = vmatpush.xpose.msra.mxu0 %v457
        %556 = vmatpush.xpose.msra.mxu0 %v454
        %557 = vmatpush.xpose.msra.mxu0 %v451
        %558 = vmatpush.xpose.msra.mxu0 %v448
        %559 = vmatmul.f32.gmra.mxu0 %v400
        %v560 = vpop.f32.mrf.mxu0
        %v561 = vadd.f32 %v321, %v560
        %562 = vmatmul.f32.gmra.mxu0 %v403
        %v563 = vpop.f32.mrf.mxu0
        %v564 = vadd.f32 %v326, %v563
        %565 = vmatmul.f32.gmra.mxu0 %v406
        %v566 = vpop.f32.mrf.mxu0
        %v567 = vadd.f32 %v331, %v566
        %568 = vmatmul.f32.gmra.mxu0 %v409
        %v569 = vpop.f32.mrf.mxu0
        %v570 = vadd.f32 %v336, %v569
        %571 = vmatmul.f32.gmra.mxu0 %v412
        %v572 = vpop.f32.mrf.mxu0
        %v573 = vadd.f32 %v341, %v572
        %574 = vmatmul.f32.gmra.mxu0 %v415
        %v575 = vpop.f32.mrf.mxu0
        %v576 = vadd.f32 %v346, %v575
        %577 = vmatmul.f32.gmra.mxu0 %v418
        %v578 = vpop.f32.mrf.mxu0
        %v579 = vadd.f32 %v351, %v578
        %580 = vmatmul.f32.gmra.mxu0 %v421
        %v581 = vpop.f32.mrf.mxu0
        %v582 = vadd.f32 %v356, %v581
        %583 = vmatmul.f32.gmra.mxu0 %v424
        %v584 = vpop.f32.mrf.mxu0
        %v585 = vadd.f32 %v361, %v584
        %586 = vmatmul.f32.gmra.mxu0 %v427
        %v587 = vpop.f32.mrf.mxu0
        %v588 = vadd.f32 %v366, %v587
        %589 = vmatmul.f32.gmra.mxu0 %v430
        %v590 = vpop.f32.mrf.mxu0
        %v591 = vadd.f32 %v371, %v590
        %592 = vmatmul.f32.gmra.mxu0 %v433
        %v593 = vpop.f32.mrf.mxu0
        %v594 = vadd.f32 %v376, %v593
        %595 = vmatmul.f32.gmra.mxu0 %v436
        %v596 = vpop.f32.mrf.mxu0
        %v597 = vadd.f32 %v381, %v596
        %598 = vmatmul.f32.gmra.mxu0 %v439
        %v599 = vpop.f32.mrf.mxu0
        %v600 = vadd.f32 %v386, %v599
        %601 = vmatmul.f32.gmra.mxu0 %v442
        %v602 = vpop.f32.mrf.mxu0
        %v603 = vadd.f32 %v391, %v602
        %604 = vmatmul.f32.gmra.mxu0 %v445
        %v605 = vpop.f32.mrf.mxu0
        %v606 = vadd.f32 %v396, %v605
        %607 = vdwg.mxu0
        %608 = vmatpush.xpose.msra.mxu0 %v541
        %609 = vmatpush.xpose.msra.mxu0 %v538
        %610 = vmatpush.xpose.msra.mxu0 %v535
        %611 = vmatpush.xpose.msra.mxu0 %v532
        %612 = vmatpush.xpose.msra.mxu0 %v529
        %613 = vmatpush.xpose.msra.mxu0 %v526
        %614 = vmatpush.xpose.msra.mxu0 %v523
        %615 = vmatpush.xpose.msra.mxu0 %v520
        %616 = vmatpush.xpose.msra.mxu0 %v517
        %617 = vmatpush.xpose.msra.mxu0 %v514
        %618 = vmatpush.xpose.msra.mxu0 %v511
        %619 = vmatpush.xpose.msra.mxu0 %v508
        %620 = vmatpush.xpose.msra.mxu0 %v505
        %621 = vmatpush.xpose.msra.mxu0 %v502
        %622 = vmatpush.xpose.msra.mxu0 %v499
        %623 = vmatpush.xpose.msra.mxu0 %v496
        %624 = vmatmul.f32.gmra.mxu0 %v400
        %v625 = vpop.f32.mrf.mxu0
        %v626 = vadd.f32 %v321, %v625
        %627 = vmatmul.f32.gmra.mxu0 %v403
        %v628 = vpop.f32.mrf.mxu0
        %v629 = vadd.f32 %v326, %v628
        %630 = vmatmul.f32.gmra.mxu0 %v406
        %v631 = vpop.f32.mrf.mxu0
        %v632 = vadd.f32 %v331, %v631
        %633 = vmatmul.f32.gmra.mxu0 %v409
        %v634 = vpop.f32.mrf.mxu0
        %v635 = vadd.f32 %v336, %v634
        %636 = vmatmul.f32.gmra.mxu0 %v412
        %v637 = vpop.f32.mrf.mxu0
        %v638 = vadd.f32 %v341, %v637
        %639 = vmatmul.f32.gmra.mxu0 %v415
        %v640 = vpop.f32.mrf.mxu0
        %v641 = vadd.f32 %v346, %v640
        %642 = vmatmul.f32.gmra.mxu0 %v418
        %v643 = vpop.f32.mrf.mxu0
        %v644 = vadd.f32 %v351, %v643
        %645 = vmatmul.f32.gmra.mxu0 %v421
        %v646 = vpop.f32.mrf.mxu0
        %v647 = vadd.f32 %v356, %v646
        %648 = vmatmul.f32.gmra.mxu0 %v424
        %v649 = vpop.f32.mrf.mxu0
        %v650 = vadd.f32 %v361, %v649
        %651 = vmatmul.f32.gmra.mxu0 %v427
        %v652 = vpop.f32.mrf.mxu0
        %v653 = vadd.f32 %v366, %v652
        %654 = vmatmul.f32.gmra.mxu0 %v430
        %v655 = vpop.f32.mrf.mxu0
        %v656 = vadd.f32 %v371, %v655
        %657 = vmatmul.f32.gmra.mxu0 %v433
        %v658 = vpop.f32.mrf.mxu0
        %v659 = vadd.f32 %v376, %v658
        %660 = vmatmul.f32.gmra.mxu0 %v436
        %v661 = vpop.f32.mrf.mxu0
        %v662 = vadd.f32 %v381, %v661
        %663 = vmatmul.f32.gmra.mxu0 %v439
        %v664 = vpop.f32.mrf.mxu0
        %v665 = vadd.f32 %v386, %v664
        %666 = vmatmul.f32.gmra.mxu0 %v442
        %v667 = vpop.f32.mrf.mxu0
        %v668 = vadd.f32 %v391, %v667
        %669 = vmatmul.f32.gmra.mxu0 %v445
        %v670 = vpop.f32.mrf.mxu0
        %v671 = vadd.f32 %v396, %v670
        %672 = vdwg.mxu0
        %v673 = vadd.f32 %v561, %v564
        %v674 = vadd.f32 %v673, %v567
        %v675 = vadd.f32 %v674, %v570
        %v676 = vadd.f32 %v675, %v573
        %v677 = vadd.f32 %v676, %v576
        %v678 = vadd.f32 %v677, %v579
        %v679 = vadd.f32 %v678, %v582
        %v680 = vadd.f32 %v679, %v585
        %v681 = vadd.f32 %v680, %v588
        %v682 = vadd.f32 %v681, %v591
        %v683 = vadd.f32 %v682, %v594
        %v684 = vadd.f32 %v683, %v597
        %v685 = vadd.f32 %v684, %v600
        %v686 = vadd.f32 %v685, %v603
        %v687 = vadd.f32 %v686, %v606
        %v688 = vrot.slane %v687, 4
        %v689 = vadd.f32 %v687, %v688
        %v690 = vrot.slane %v689, 2
        %v691 = vadd.f32 %v689, %v690
        %v692 = vrot.slane %v691, 1
        %v693 = vadd.f32 %v691, %v692
        %v694 = vadd.f32 %v626, %v629
        %v695 = vadd.f32 %v694, %v632
        %v696 = vadd.f32 %v695, %v635
        %v697 = vadd.f32 %v696, %v638
        %v698 = vadd.f32 %v697, %v641
        %v699 = vadd.f32 %v698, %v644
        %v700 = vadd.f32 %v699, %v647
        %v701 = vadd.f32 %v700, %v650
        %v702 = vadd.f32 %v701, %v653
        %v703 = vadd.f32 %v702, %v656
        %v704 = vadd.f32 %v703, %v659
        %v705 = vadd.f32 %v704, %v662
        %v706 = vadd.f32 %v705, %v665
        %v707 = vadd.f32 %v706, %v668
        %v708 = vadd.f32 %v707, %v671
        %v709 = vrot.slane %v708, 4
        %v710 = vadd.f32 %v708, %v709
        %v711 = vrot.slane %v710, 2
        %v712 = vadd.f32 %v710, %v711
        %v713 = vrot.slane %v712, 1
        %v714 = vadd.f32 %v712, %v713
        %v715 = vmul.f32 %v561, %v561
        %v716 = vmul.f32 %v626, %v626
        %v717 = vmul.f32 %v564, %v564
        %v718 = vmul.f32 %v629, %v629
        %v719 = vmul.f32 %v567, %v567
        %v720 = vmul.f32 %v632, %v632
        %v721 = vmul.f32 %v570, %v570
        %v722 = vmul.f32 %v635, %v635
        %v723 = vmul.f32 %v573, %v573
        %v724 = vmul.f32 %v638, %v638
        %v725 = vmul.f32 %v576, %v576
        %v726 = vmul.f32 %v641, %v641
        %v727 = vmul.f32 %v579, %v579
        %v728 = vmul.f32 %v644, %v644
        %v729 = vmul.f32 %v582, %v582
        %v730 = vmul.f32 %v647, %v647
        %v731 = vmul.f32 %v585, %v585
        %v732 = vmul.f32 %v650, %v650
        %v733 = vmul.f32 %v588, %v588
        %v734 = vmul.f32 %v653, %v653
        %v735 = vmul.f32 %v591, %v591
        %v736 = vmul.f32 %v656, %v656
        %v737 = vmul.f32 %v594, %v594
        %v738 = vmul.f32 %v659, %v659
        %v739 = vmul.f32 %v597, %v597
        %v740 = vmul.f32 %v662, %v662
        %v741 = vmul.f32 %v600, %v600
        %v742 = vmul.f32 %v665, %v665
        %v743 = vmul.f32 %v603, %v603
        %v744 = vmul.f32 %v668, %v668
        %v745 = vmul.f32 %v606, %v606
        %v746 = vmul.f32 %v671, %v671
        %v747 = vadd.f32 %v715, %v717
        %v748 = vadd.f32 %v747, %v719
        %v749 = vadd.f32 %v748, %v721
        %v750 = vadd.f32 %v749, %v723
        %v751 = vadd.f32 %v750, %v725
        %v752 = vadd.f32 %v751, %v727
        %v753 = vadd.f32 %v752, %v729
        %v754 = vadd.f32 %v753, %v731
        %v755 = vadd.f32 %v754, %v733
        %v756 = vadd.f32 %v755, %v735
        %v757 = vadd.f32 %v756, %v737
        %v758 = vadd.f32 %v757, %v739
        %v759 = vadd.f32 %v758, %v741
        %v760 = vadd.f32 %v759, %v743
        %v761 = vadd.f32 %v760, %v745
        %v762 = vrot.slane %v761, 4
        %v763 = vadd.f32 %v761, %v762
        %v764 = vrot.slane %v763, 2
        %v765 = vadd.f32 %v763, %v764
        %v766 = vrot.slane %v765, 1
        %v767 = vadd.f32 %v765, %v766
        %v768 = vadd.f32 %v716, %v718
        %v769 = vadd.f32 %v768, %v720
        %v770 = vadd.f32 %v769, %v722
        %v771 = vadd.f32 %v770, %v724
        %v772 = vadd.f32 %v771, %v726
        %v773 = vadd.f32 %v772, %v728
        %v774 = vadd.f32 %v773, %v730
        %v775 = vadd.f32 %v774, %v732
        %v776 = vadd.f32 %v775, %v734
        %v777 = vadd.f32 %v776, %v736
        %v778 = vadd.f32 %v777, %v738
        %v779 = vadd.f32 %v778, %v740
        %v780 = vadd.f32 %v779, %v742
        %v781 = vadd.f32 %v780, %v744
        %v782 = vadd.f32 %v781, %v746
        %v783 = vrot.slane %v782, 4
        %v784 = vadd.f32 %v782, %v783
        %v785 = vrot.slane %v784, 2
        %v786 = vadd.f32 %v784, %v785
        %v787 = vrot.slane %v786, 1
        %v788 = vadd.f32 %v786, %v787
        %v789 = vmul.f32 %v693, 0.0078125
        %v790 = vmul.f32 %v714, 0.0078125
        %v791 = vmul.f32 %v767, 0.0078125
        %v792 = vmul.f32 %v788, 0.0078125
        %v793 = vmul.f32 %v789, %v789
        %v794 = vmul.f32 %v790, %v790
        %v795 = vsub.f32 %v791, %v793
        %v796 = vsub.f32 %v792, %v794
        %v797 = vadd.f32 %v795, 1e-05
        %v798 = vadd.f32 %v796, 1e-05
        %v799 = vrsqrt.pop %v797
        %v800 = vmul.f32 %v799, %v797
        %v801 = vmul.f32 %v800, %v799
        %v802 = vmul.f32 0.5, %v801
        %v803 = vsub.f32 1.5, %v802
        %v804 = vmul.f32 %v799, %v803
        %vm805 = vweird.f32 %v797
        %vm806 = vweird.f32 %v799
        %vm807 = vmor %vm805, %vm806
        %v808 = vsel %vm807, %v799, %v804
        %v809 = vrsqrt.pop %v798
        %v810 = vmul.f32 %v809, %v798
        %v811 = vmul.f32 %v810, %v809
        %v812 = vmul.f32 0.5, %v811
        %v813 = vsub.f32 1.5, %v812
        %v814 = vmul.f32 %v809, %v813
        %vm815 = vweird.f32 %v798
        %vm816 = vweird.f32 %v809
        %vm817 = vmor %vm815, %vm816
        %v818 = vsel %vm817, %v809, %v814
        %v819 = vsub.f32 %v561, %v789
        %v820 = vsub.f32 %v626, %v790
        %v821 = vsub.f32 %v564, %v789
        %v822 = vsub.f32 %v629, %v790
        %v823 = vsub.f32 %v567, %v789
        %v824 = vsub.f32 %v632, %v790
        %v825 = vsub.f32 %v570, %v789
        %v826 = vsub.f32 %v635, %v790
        %v827 = vsub.f32 %v573, %v789
        %v828 = vsub.f32 %v638, %v790
        %v829 = vsub.f32 %v576, %v789
        %v830 = vsub.f32 %v641, %v790
        %v831 = vsub.f32 %v579, %v789
        %v832 = vsub.f32 %v644, %v790
        %v833 = vsub.f32 %v582, %v789
        %v834 = vsub.f32 %v647, %v790
        %v835 = vsub.f32 %v585, %v789
        %v836 = vsub.f32 %v650, %v790
        %v837 = vsub.f32 %v588, %v789
        %v838 = vsub.f32 %v653, %v790
        %v839 = vsub.f32 %v591, %v789
        %v840 = vsub.f32 %v656, %v790
        %v841 = vsub.f32 %v594, %v789
        %v842 = vsub.f32 %v659, %v790
        %v843 = vsub.f32 %v597, %v789
        %v844 = vsub.f32 %v662, %v790
        %v845 = vsub.f32 %v600, %v789
        %v846 = vsub.f32 %v665, %v790
        %v847 = vsub.f32 %v603, %v789
        %v848 = vsub.f32 %v668, %v790
        %v849 = vsub.f32 %v606, %v789
        %v850 = vsub.f32 %v671, %v790
        %v851 = vmul.f32 %v819, %v808
        %v852 = vmul.f32 %v820, %v818
        %v853 = vmul.f32 %v821, %v808
        %v854 = vmul.f32 %v822, %v818
        %v855 = vmul.f32 %v823, %v808
        %v856 = vmul.f32 %v824, %v818
        %v857 = vmul.f32 %v825, %v808
        %v858 = vmul.f32 %v826, %v818
        %v859 = vmul.f32 %v827, %v808
        %v860 = vmul.f32 %v828, %v818
        %v861 = vmul.f32 %v829, %v808
        %v862 = vmul.f32 %v830, %v818
        %v863 = vmul.f32 %v831, %v808
        %v864 = vmul.f32 %v832, %v818
        %v865 = vmul.f32 %v833, %v808
        %v866 = vmul.f32 %v834, %v818
        %v867 = vmul.f32 %v835, %v808
        %v868 = vmul.f32 %v836, %v818
        %v869 = vmul.f32 %v837, %v808
        %v870 = vmul.f32 %v838, %v818
        %v871 = vmul.f32 %v839, %v808
        %v872 = vmul.f32 %v840, %v818
        %v873 = vmul.f32 %v841, %v808
        %v874 = vmul.f32 %v842, %v818
        %v875 = vmul.f32 %v843, %v808
        %v876 = vmul.f32 %v844, %v818
        %v877 = vmul.f32 %v845, %v808
        %v878 = vmul.f32 %v846, %v818
        %v879 = vmul.f32 %v847, %v808
        %v880 = vmul.f32 %v848, %v818
        %v881 = vmul.f32 %v849, %v808
        %v882 = vmul.f32 %v850, %v818
        %v883 = vld [vmem:[%s3] sm:$0xff]
        %v884 = vld [vmem:[%s3 + $0x8] sm:$0xff]
        %v885 = vld [vmem:[%s3 + $0x10] sm:$0xff]
        %v886 = vld [vmem:[%s3 + $0x18] sm:$0xff]
        %v887 = vld [vmem:[%s3 + $0x20] sm:$0xff]
        %v888 = vld [vmem:[%s3 + $0x28] sm:$0xff]
        %v889 = vld [vmem:[%s3 + $0x30] sm:$0xff]
        %v890 = vld [vmem:[%s3 + $0x38] sm:$0xff]
        %v891 = vld [vmem:[%s3 + $0x40] sm:$0xff]
        %v892 = vld [vmem:[%s3 + $0x48] sm:$0xff]
        %v893 = vld [vmem:[%s3 + $0x50] sm:$0xff]
        %v894 = vld [vmem:[%s3 + $0x58] sm:$0xff]
        %v895 = vld [vmem:[%s3 + $0x60] sm:$0xff]
        %v896 = vld [vmem:[%s3 + $0x68] sm:$0xff]
        %v897 = vld [vmem:[%s3 + $0x70] sm:$0xff]
        %v898 = vld [vmem:[%s3 + $0x78] sm:$0xff]
        %900 = vset.pattern.permute.xlu0 0
        %901 = vperm.xlu0 %900, %v883
        %v902 = vpop.permute.xlu0 %901
        %905 = vset.pattern.permute.xlu0 0
        %906 = vperm.xlu0 %905, %v884
        %v907 = vpop.permute.xlu0 %906
        %910 = vset.pattern.permute.xlu0 0
        %911 = vperm.xlu0 %910, %v885
        %v912 = vpop.permute.xlu0 %911
        %915 = vset.pattern.permute.xlu0 0
        %916 = vperm.xlu0 %915, %v886
        %v917 = vpop.permute.xlu0 %916
        %920 = vset.pattern.permute.xlu0 0
        %921 = vperm.xlu0 %920, %v887
        %v922 = vpop.permute.xlu0 %921
        %925 = vset.pattern.permute.xlu0 0
        %926 = vperm.xlu0 %925, %v888
        %v927 = vpop.permute.xlu0 %926
        %930 = vset.pattern.permute.xlu0 0
        %931 = vperm.xlu0 %930, %v889
        %v932 = vpop.permute.xlu0 %931
        %935 = vset.pattern.permute.xlu0 0
        %936 = vperm.xlu0 %935, %v890
        %v937 = vpop.permute.xlu0 %936
        %940 = vset.pattern.permute.xlu0 0
        %941 = vperm.xlu0 %940, %v891
        %v942 = vpop.permute.xlu0 %941
        %945 = vset.pattern.permute.xlu0 0
        %946 = vperm.xlu0 %945, %v892
        %v947 = vpop.permute.xlu0 %946
        %950 = vset.pattern.permute.xlu0 0
        %951 = vperm.xlu0 %950, %v893
        %v952 = vpop.permute.xlu0 %951
        %955 = vset.pattern.permute.xlu0 0
        %956 = vperm.xlu0 %955, %v894
        %v957 = vpop.permute.xlu0 %956
        %960 = vset.pattern.permute.xlu0 0
        %961 = vperm.xlu0 %960, %v895
        %v962 = vpop.permute.xlu0 %961
        %965 = vset.pattern.permute.xlu0 0
        %966 = vperm.xlu0 %965, %v896
        %v967 = vpop.permute.xlu0 %966
        %970 = vset.pattern.permute.xlu0 0
        %971 = vperm.xlu0 %970, %v897
        %v972 = vpop.permute.xlu0 %971
        %975 = vset.pattern.permute.xlu0 0
        %976 = vperm.xlu0 %975, %v898
        %v977 = vpop.permute.xlu0 %976
        %v979 = vmul.f32 %v851, %v902
        %v980 = vmul.f32 %v852, %v902
        %v981 = vmul.f32 %v853, %v907
        %v982 = vmul.f32 %v854, %v907
        %v983 = vmul.f32 %v855, %v912
        %v984 = vmul.f32 %v856, %v912
        %v985 = vmul.f32 %v857, %v917
        %v986 = vmul.f32 %v858, %v917
        %v987 = vmul.f32 %v859, %v922
        %v988 = vmul.f32 %v860, %v922
        %v989 = vmul.f32 %v861, %v927
        %v990 = vmul.f32 %v862, %v927
        %v991 = vmul.f32 %v863, %v932
        %v992 = vmul.f32 %v864, %v932
        %v993 = vmul.f32 %v865, %v937
        %v994 = vmul.f32 %v866, %v937
        %v995 = vmul.f32 %v867, %v942
        %v996 = vmul.f32 %v868, %v942
        %v997 = vmul.f32 %v869, %v947
        %v998 = vmul.f32 %v870, %v947
        %v999 = vmul.f32 %v871, %v952
        %v1000 = vmul.f32 %v872, %v952
        %v1001 = vmul.f32 %v873, %v957
        %v1002 = vmul.f32 %v874, %v957
        %v1003 = vmul.f32 %v875, %v962
        %v1004 = vmul.f32 %v876, %v962
        %v1005 = vmul.f32 %v877, %v967
        %v1006 = vmul.f32 %v878, %v967
        %v1007 = vmul.f32 %v879, %v972
        %v1008 = vmul.f32 %v880, %v972
        %v1009 = vmul.f32 %v881, %v977
        %v1010 = vmul.f32 %v882, %v977
        %v1011 = vld [vmem:[%s4] sm:$0xff]
        %v1012 = vld [vmem:[%s4 + $0x8] sm:$0xff]
        %v1013 = vld [vmem:[%s4 + $0x10] sm:$0xff]
        %v1014 = vld [vmem:[%s4 + $0x18] sm:$0xff]
        %v1015 = vld [vmem:[%s4 + $0x20] sm:$0xff]
        %v1016 = vld [vmem:[%s4 + $0x28] sm:$0xff]
        %v1017 = vld [vmem:[%s4 + $0x30] sm:$0xff]
        %v1018 = vld [vmem:[%s4 + $0x38] sm:$0xff]
        %v1019 = vld [vmem:[%s4 + $0x40] sm:$0xff]
        %v1020 = vld [vmem:[%s4 + $0x48] sm:$0xff]
        %v1021 = vld [vmem:[%s4 + $0x50] sm:$0xff]
        %v1022 = vld [vmem:[%s4 + $0x58] sm:$0xff]
        %v1023 = vld [vmem:[%s4 + $0x60] sm:$0xff]
        %v1024 = vld [vmem:[%s4 + $0x68] sm:$0xff]
        %v1025 = vld [vmem:[%s4 + $0x70] sm:$0xff]
        %v1026 = vld [vmem:[%s4 + $0x78] sm:$0xff]
        %1028 = vset.pattern.permute.xlu0 0
        %1029 = vperm.xlu0 %1028, %v1011
        %v1030 = vpop.permute.xlu0 %1029
        %1033 = vset.pattern.permute.xlu0 0
        %1034 = vperm.xlu0 %1033, %v1012
        %v1035 = vpop.permute.xlu0 %1034
        %1038 = vset.pattern.permute.xlu0 0
        %1039 = vperm.xlu0 %1038, %v1013
        %v1040 = vpop.permute.xlu0 %1039
        %1043 = vset.pattern.permute.xlu0 0
        %1044 = vperm.xlu0 %1043, %v1014
        %v1045 = vpop.permute.xlu0 %1044
        %1048 = vset.pattern.permute.xlu0 0
        %1049 = vperm.xlu0 %1048, %v1015
        %v1050 = vpop.permute.xlu0 %1049
        %1053 = vset.pattern.permute.xlu0 0
        %1054 = vperm.xlu0 %1053, %v1016
        %v1055 = vpop.permute.xlu0 %1054
        %1058 = vset.pattern.permute.xlu0 0
        %1059 = vperm.xlu0 %1058, %v1017
        %v1060 = vpop.permute.xlu0 %1059
        %1063 = vset.pattern.permute.xlu0 0
        %1064 = vperm.xlu0 %1063, %v1018
        %v1065 = vpop.permute.xlu0 %1064
        %1068 = vset.pattern.permute.xlu0 0
        %1069 = vperm.xlu0 %1068, %v1019
        %v1070 = vpop.permute.xlu0 %1069
        %1073 = vset.pattern.permute.xlu0 0
        %1074 = vperm.xlu0 %1073, %v1020
        %v1075 = vpop.permute.xlu0 %1074
        %1078 = vset.pattern.permute.xlu0 0
        %1079 = vperm.xlu0 %1078, %v1021
        %v1080 = vpop.permute.xlu0 %1079
        %1083 = vset.pattern.permute.xlu0 0
        %1084 = vperm.xlu0 %1083, %v1022
        %v1085 = vpop.permute.xlu0 %1084
        %1088 = vset.pattern.permute.xlu0 0
        %1089 = vperm.xlu0 %1088, %v1023
        %v1090 = vpop.permute.xlu0 %1089
        %1093 = vset.pattern.permute.xlu0 0
        %1094 = vperm.xlu0 %1093, %v1024
        %v1095 = vpop.permute.xlu0 %1094
        %1098 = vset.pattern.permute.xlu0 0
        %1099 = vperm.xlu0 %1098, %v1025
        %v1100 = vpop.permute.xlu0 %1099
        %1103 = vset.pattern.permute.xlu0 0
        %1104 = vperm.xlu0 %1103, %v1026
        %v1105 = vpop.permute.xlu0 %1104
        %v1107 = vadd.f32 %v979, %v1030
        %v1108 = vadd.f32 %v980, %v1030
        %v1109 = vadd.f32 %v981, %v1035
        %v1110 = vadd.f32 %v982, %v1035
        %v1111 = vadd.f32 %v983, %v1040
        %v1112 = vadd.f32 %v984, %v1040
        %v1113 = vadd.f32 %v985, %v1045
        %v1114 = vadd.f32 %v986, %v1045
        %v1115 = vadd.f32 %v987, %v1050
        %v1116 = vadd.f32 %v988, %v1050
        %v1117 = vadd.f32 %v989, %v1055
        %v1118 = vadd.f32 %v990, %v1055
        %v1119 = vadd.f32 %v991, %v1060
        %v1120 = vadd.f32 %v992, %v1060
        %v1121 = vadd.f32 %v993, %v1065
        %v1122 = vadd.f32 %v994, %v1065
        %v1123 = vadd.f32 %v995, %v1070
        %v1124 = vadd.f32 %v996, %v1070
        %v1125 = vadd.f32 %v997, %v1075
        %v1126 = vadd.f32 %v998, %v1075
        %v1127 = vadd.f32 %v999, %v1080
        %v1128 = vadd.f32 %v1000, %v1080
        %v1129 = vadd.f32 %v1001, %v1085
        %v1130 = vadd.f32 %v1002, %v1085
        %v1131 = vadd.f32 %v1003, %v1090
        %v1132 = vadd.f32 %v1004, %v1090
        %v1133 = vadd.f32 %v1005, %v1095
        %v1134 = vadd.f32 %v1006, %v1095
        %v1135 = vadd.f32 %v1007, %v1100
        %v1136 = vadd.f32 %v1008, %v1100
        %v1137 = vadd.f32 %v1009, %v1105
        %v1138 = vadd.f32 %v1010, %v1105
        %1139 = vst [vmem:[%s242] sm:$0xff] %v1107
        %1140 = vst [vmem:[%s242 + $0x8] sm:$0xff] %v1108
        %1141 = vst [vmem:[%s242 + $0x10] sm:$0xff] %v1109
        %1142 = vst [vmem:[%s242 + $0x18] sm:$0xff] %v1110
        %1143 = vst [vmem:[%s242 + $0x20] sm:$0xff] %v1111
        %1144 = vst [vmem:[%s242 + $0x28] sm:$0xff] %v1112
        %1145 = vst [vmem:[%s242 + $0x30] sm:$0xff] %v1113
        %1146 = vst [vmem:[%s242 + $0x38] sm:$0xff] %v1114
        %1147 = vst [vmem:[%s242 + $0x40] sm:$0xff] %v1115
        %1148 = vst [vmem:[%s242 + $0x48] sm:$0xff] %v1116
        %1149 = vst [vmem:[%s242 + $0x50] sm:$0xff] %v1117
        %1150 = vst [vmem:[%s242 + $0x58] sm:$0xff] %v1118
        %1151 = vst [vmem:[%s242 + $0x60] sm:$0xff] %v1119
        %1152 = vst [vmem:[%s242 + $0x68] sm:$0xff] %v1120
        %1153 = vst [vmem:[%s242 + $0x70] sm:$0xff] %v1121
        %1154 = vst [vmem:[%s242 + $0x78] sm:$0xff] %v1122
        %1155 = vst [vmem:[%s242 + $0x80] sm:$0xff] %v1123
        %1156 = vst [vmem:[%s242 + $0x88] sm:$0xff] %v1124
        %1157 = vst [vmem:[%s242 + $0x90] sm:$0xff] %v1125
        %1158 = vst [vmem:[%s242 + $0x98] sm:$0xff] %v1126
        %1159 = vst [vmem:[%s242 + $0xa0] sm:$0xff] %v1127
        %1160 = vst [vmem:[%s242 + $0xa8] sm:$0xff] %v1128
        %1161 = vst [vmem:[%s242 + $0xb0] sm:$0xff] %v1129
        %1162 = vst [vmem:[%s242 + $0xb8] sm:$0xff] %v1130
        %1163 = vst [vmem:[%s242 + $0xc0] sm:$0xff] %v1131
        %1164 = vst [vmem:[%s242 + $0xc8] sm:$0xff] %v1132
        %1165 = vst [vmem:[%s242 + $0xd0] sm:$0xff] %v1133
        %1166 = vst [vmem:[%s242 + $0xd8] sm:$0xff] %v1134
        %1167 = vst [vmem:[%s242 + $0xe0] sm:$0xff] %v1135
        %1168 = vst [vmem:[%s242 + $0xe8] sm:$0xff] %v1136
        %1169 = vst [vmem:[%s242 + $0xf0] sm:$0xff] %v1137
        %1170 = vst [vmem:[%s242 + $0xf8] sm:$0xff] %v1138
        %s1171 = sand.u32 %s153, 1
        %s1172 = scalar_lea.sflag [#allocation3], %s1171
        %s1173 = sand.u32 %s153, 1
        %s1174 = smul.addr %s1173, 256
        %s1175 = scalar_lea.vmem [#allocation2], %s1174
        // Predicated region
        $region41: #{tpu_custom_call.1} parent=39 // pred_check
          %p1176 = pneg %p163
        $region42: #{tpu_custom_call.1} parent=39 // pred_check_branch
          %1178 = sbr.rel (%p1176) target = $region44
        $region43: #{tpu_custom_call.1} parent=39 // pred_region
          %s1179 = smul.u32 2, %s24
          %1181 = vsyncadd %s1172, 0
          %s1182 = smul.addr %s23, 32
          %s1183 = sadd.s32 %s1179, %s1182
          %s1184 = smul.addr %s1183, 8
          %s1185 = scalar_lea.hbm %s5, %s1184
          %s1186 = sshll.u32 %s1175, 4
          %s1187 = int_to_ptr.vmem [resolvable:$true] %s1186
          %s1188 = sshll.u32 %s1185, 4
          %s1189 = int_to_ptr.hbm [resolvable:$true] %s1188
          %1194 = dma.vmem_to_hbm [thread:$0]  %s1187, 4096, %s1189, %s1172, 256, 256, 16
        $region44: #{tpu_custom_call.1} parent=39 // pred_fallthru
          _
      $region40: #{tpu_custom_call.1} parent=5 // pred_fallthru
        _
      %p1195 = scmp.le.s32.totalorder 2, %s14
      // Predicated region
      $region45: #{tpu_custom_call.1} parent=5 // pred_check
        %p1196 = pneg %p1195
      $region46: #{tpu_custom_call.1} parent=5 // pred_check_branch
        %1198 = sbr.rel (%p1196) target = $region48
      $region47: #{tpu_custom_call.1} parent=5 // pred_region
        %s1199 = ssub.s32 %s14, 2
        // Predicated region
        $region49: #{tpu_custom_call.1} parent=47 // pred_check
          %p1200 = pneg %p169
        $region50: #{tpu_custom_call.1} parent=47 // pred_check_branch
          %1202 = sbr.rel (%p1200) target = $region52
        $region51: #{tpu_custom_call.1} parent=47 // pred_region
          %s1203 = sand.u32 %s154, 1
          %s1204 = scalar_lea.sflag [#allocation3], %s1203
          %s1205 = sand.u32 %s154, 1
          %s1206 = smul.addr %s1205, 256
          %s1207 = scalar_lea.vmem [#allocation2], %s1206
          %1209 = dma.done %s1204, 4096
        $region52: #{tpu_custom_call.1} parent=47 // pred_fallthru
          _
      $region48: #{tpu_custom_call.1} parent=5 // pred_fallthru
        _
    $region6: #{tpu_custom_call.1} parent=1 // loop_footer
      %s18 = sadd.s32 1, %s14
    $region7: #{tpu_custom_call.1} parent=1 // loop_footer_branch
      %13 = sbr.rel target = $region3
    $region8: #{tpu_custom_call.1} parent=1 // loop_exit
      _
    %1210 = vsyncpa [#allocation3], 1
    %s1211 = scalar_lea.sflag [#allocation3], 1
    %1212 = vsyncpa %s1211, 1

</llo_original>
